<compile_context>
chip_gen: v7x
topology: tpu7x:2x2x1
jax: 0.10.0
libtpu: 0.0.40
codegen_flags: <defaults>
</compile_context>

<pallas_src>
import functools

import numpy as np
import jax
import jax.numpy as jnp
from jax.experimental import pallas as pl
from jax.experimental.pallas import tpu as pltpu

_LANES = 128
_TR_TARGET = 512  # flat sublane rows per tile: 512*128*4 B = 256 KiB per buffer


def _round_up(x: int, m: int) -> int:
    return ((x + m - 1) // m) * m


def build_position_encoding_table(model_dim: int, max_seq_len: int) -> jnp.ndarray:
    """(max_seq_len+1, model_dim) float32 table identical to the PyTorch __init__."""
    pos = np.arange(max_seq_len, dtype=np.float64)[:, None]          # (S, 1)
    j = np.arange(model_dim, dtype=np.float64)[None, :]              # (1, D)
    pe = pos / np.power(10000.0, 2.0 * (j // 2) / model_dim)         # (S, D)
    pe[:, 0::2] = np.sin(pe[:, 0::2])
    pe[:, 1::2] = np.cos(pe[:, 1::2])
    pad_row = np.zeros((1, model_dim), dtype=np.float64)
    table = np.concatenate([pad_row, pe], axis=0).astype(np.float32)  # (S+1, D)
    return jnp.asarray(table)


def _pe_kernel(model_dim, len_ref, table_ref, out_ref):
    # len_ref  : SMEM (B,)         int32   (scalar-prefetched sequence lengths)
    # table_ref: VMEM (tR, 128)    float32 (lane-dense tile of the flattened table body)
    # out_ref  : VMEM (1, tR, 128) float32 (matching tile of one batch element's output)
    b = pl.program_id(0)
    l = pl.program_id(1)
    tR = out_ref.shape[1]

    # Flat element index f = t*D + d for every lane of this tile.
    base = l * tR * _LANES
    r = jax.lax.broadcasted_iota(jnp.int32, (tR, _LANES), 0)
    c = jax.lax.broadcasted_iota(jnp.int32, (tR, _LANES), 1)
    flat_idx = base + r * _LANES + c

    # Valid prefix of the flattened (L, D) slab is exactly len_b * D elements;
    # everything past it corresponds to the zero pad row.
    valid = flat_idx < len_ref[b] * model_dim

    out_ref[...] = jnp.where(valid, table_ref[...], 0.0)[None]


def positional_encoding_forward(input_len: jnp.ndarray,
                                table: jnp.ndarray,
                                max_len: int) -> jnp.ndarray:
    """input_len: (B,) int; table: (max_seq_len+1, D) f32 -> (B, max_len, D) f32.

    Requires max(input_len) <= max_seq_len (same precondition as the PyTorch
    embedding lookup)."""
    B = input_len.shape[0]
    D = table.shape[1]

    # Strip the pad row host-side (padding is handled by the in-kernel mask)
    # and flatten to a lane-dense layout.
    flat = table[1:].reshape(-1)                                      # (S*D,)

    F = max_len * D                                                   # flat size per batch elem
    if F <= _TR_TARGET * _LANES:
        tR = max(8, _round_up(pl.cdiv(F, _LANES), 8))
        n_tiles = 1
    else:
        tR = _TR_TARGET
        n_tiles = pl.cdiv(F, tR * _LANES)
    F_pad = n_tiles * tR * _LANES
    R_pad = F_pad // _LANES

    # Pad (or trim) the flat table body to exactly F_pad elements; any element
    # with index >= len_b * D is masked to zero in-kernel, so the padding value
    # is irrelevant.
    if F_pad > flat.shape[0]:
        flat = jnp.concatenate(
            [flat, jnp.zeros((F_pad - flat.shape[0],), flat.dtype)])
    else:
        flat = flat[:F_pad]
    table2d = flat.reshape(R_pad, _LANES)                             # (R_pad, 128)

    grid_spec = pltpu.PrefetchScalarGridSpec(
        num_scalar_prefetch=1,
        grid=(B, n_tiles),
        in_specs=[pl.BlockSpec((tR, _LANES), lambda b, l, lens: (l, 0))],
        out_specs=pl.BlockSpec((1, tR, _LANES), lambda b, l, lens: (b, l, 0)),
    )

    out_flat = pl.pallas_call(
        functools.partial(_pe_kernel, D),
        out_shape=jax.ShapeDtypeStruct((B, R_pad, _LANES), jnp.float32),
        grid_spec=grid_spec,
        compiler_params=pltpu.CompilerParams(
            dimension_semantics=("parallel", "parallel")),
    )(input_len.astype(jnp.int32), table2d)

    # Back to the module's (B, max_len, D) layout (cheap wrapper-side reshape).
    return out_flat.reshape(B, F_pad)[:, :F].reshape(B, max_len, D)


if __name__ == "__main__":
    # Small shapes consistent with the module.
    model_dim = 32
    max_seq_len = 8
    batch = 2

    table = build_position_encoding_table(model_dim, max_seq_len)

    key = jax.random.PRNGKey(0)
    input_len = jax.random.randint(key, (batch,), 1, max_seq_len + 1,
                                   dtype=jnp.int32)

    # max_len is data-dependent in PyTorch; resolved on host as glue.
    max_len = int(jnp.max(input_len))
    # Same precondition as the PyTorch embedding (would raise an index error).
    assert max_len <= max_seq_len, "input_len exceeds max_seq_len"

    out = positional_encoding_forward(input_len, table, max_len)
    out = jax.block_until_ready(out)

    # Pure-JAX / numpy reference with identical gather semantics.
    lens_np = np.asarray(input_len)
    t = np.arange(max_len)[None, :]
    idx_ref = np.where(t < lens_np[:, None], t + 1, 0)
    ref = np.asarray(table)[idx_ref]                                  # (B, L, D)
    np.testing.assert_allclose(np.asarray(out), ref, rtol=1e-6, atol=1e-6)

    print("KERNEL_OK")
</pallas_src>

<mosaic_0001>
module attributes {stable_mosaic.version = 11 : i64} {
  func.func @_pe_kernel(%arg0: i32, %arg1: i32, %arg2: memref<2xi32, #tpu.memory_space<smem>>, %arg3: memref<8x128xf32, #tpu.memory_space<vmem>>, %arg4: memref<1x8x128xf32, #tpu.memory_space<vmem>>) attributes {dimension_semantics = [#tpu.dimension_semantics<parallel>, #tpu.dimension_semantics<parallel>], iteration_bounds = array<i64: 2, 1>, scalar_prefetch = 1 : i64, scratch_operands = 0 : i64, tpu.core_type = #tpu.core_type<tc>, window_params = [{transform_indices = @transform_0, window_bounds = array<i64: 8, 128>}, {transform_indices = @transform_1, window_bounds = array<i64: 1, 8, 128>}]} {
    %c8_i32 = arith.constant 8 : i32
    %0 = arith.muli %arg1, %c8_i32 : i32
    %c128_i32 = arith.constant 128 : i32
    %1 = arith.muli %0, %c128_i32 : i32
    %2 = tpu.iota {dimensions = array<i32: 0>} : vector<8x128xi32>
    %3 = tpu.iota {dimensions = array<i32: 1>} : vector<8x128xi32>
    %c128_i32_0 = arith.constant 128 : i32
    %4 = vector.broadcast %c128_i32_0 : i32 to vector<8x128xi32>
    %5 = arith.muli %2, %4 : vector<8x128xi32>
    %6 = vector.broadcast %1 : i32 to vector<8x128xi32>
    %7 = arith.addi %6, %5 : vector<8x128xi32>
    %8 = arith.addi %7, %3 : vector<8x128xi32>
    %9 = arith.index_cast %arg0 : i32 to index
    %10 = memref.load %arg2[%9] : memref<2xi32, #tpu.memory_space<smem>>
    %c32_i32 = arith.constant 32 : i32
    %11 = arith.muli %10, %c32_i32 : i32
    %12 = vector.broadcast %11 : i32 to vector<8x128xi32>
    %13 = arith.cmpi slt, %8, %12 : vector<8x128xi32>
    %c0 = arith.constant 0 : index
    %c0_1 = arith.constant 0 : index
    %14 = vector.load %arg3[%c0, %c0_1] : memref<8x128xf32, #tpu.memory_space<vmem>>, vector<8x128xf32>
    %cst = arith.constant 0.000000e+00 : f32
    %15 = vector.broadcast %cst : f32 to vector<8x128xf32>
    %16 = arith.select %13, %14, %15 : vector<8x128xi1>, vector<8x128xf32>
    %17 = vector.shape_cast %16 : vector<8x128xf32> to vector<1x8x128xf32>
    %c0_2 = arith.constant 0 : index
    %c0_3 = arith.constant 0 : index
    %c0_4 = arith.constant 0 : index
    %18 = vector.load %arg4[%c0_2, %c0_3, %c0_4] : memref<1x8x128xf32, #tpu.memory_space<vmem>>, vector<1x8x128xf32>
    tpu.vector_store %arg4[%c0_2, %c0_3, %c0_4], %17 {strides = array<i32>} : memref<1x8x128xf32, #tpu.memory_space<vmem>>, vector<1x8x128xf32>,
    return
  }
  func.func @transform_0(%arg0: i32, %arg1: i32, %arg2: memref<2xi32, #tpu.memory_space<smem>>) -> (i32, i32) {
    %c0_i32 = arith.constant 0 : i32
    %c0_i32_0 = arith.constant 0 : i32
    return %arg1, %c0_i32 : i32, i32
  }
  func.func @transform_1(%arg0: i32, %arg1: i32, %arg2: memref<2xi32, #tpu.memory_space<smem>>) -> (i32, i32, i32) {
    %c0_i32 = arith.constant 0 : i32
    %c0_i32_0 = arith.constant 0 : i32
    return %arg0, %arg1, %c0_i32 : i32, i32, i32
  }
}

</mosaic_0001>

<llo_original>
// kernel: tpu_custom_call.1
$region0: #{tpu_custom_call.1}
  #allocation0 [shape = 'u32[]', space=smem, size = 0x4, offset = 0x4, fixed_abs, tag = 'smem constant byte address 0x4 - core index']
  #allocation1 [shape = 'u32[144,128]{1,0:T(1,128)}', space=vmem, size = 0x12000, scoped, tag = 'internal scratch']
  #allocation2 [shape = 's32[1]{0}', space=sflag, size = 0x4, scoped, tag = 'scoped memory for tpu_custom_call.1']
  #allocation3 [shape = 'u8[512]{0}', space=smem, size = 0x200, scoped, tag = 'prefetched SMEM operand 0']
  %s0 = inlined_call_operand.hbm [shape: s32[2], index: 0, kind: input, shape index: {}]
  %s1 = inlined_call_operand.hbm [shape: f32[8,128], index: 1, kind: input, shape index: {}]
  %s2 = inlined_call_operand.hbm [shape: f32[2,8,128], index: 2, kind: output, shape index: {}]
  %s3 = sld [smem:[#allocation0]]
  $region41: #{tpu_custom_call.1} parent=0
    _
  %s5 = ssub.s32 1, %s3
  %s6 = scalar_select 0, %s5, %s3
  %8 = dma.hbm_to_smem %s0, 16, [#allocation3], [#allocation2]
  %9 = dma.done [#allocation2], 16
  %10 = sfence
  $region1: #{tpu_custom_call.1} parent=0
    #allocation4 [shape = 'u8[4096]{0}', space=vmem, size = 0x1000, scoped, tag = 'input window, operand 1, single buffered']
    #allocation5 [shape = 's32[2]{0}', space=sflag, size = 0x8, scoped, tag = 'scoped memory for tpu_custom_call.1']
    #allocation6 [shape = 's32[2]{0}', space=sflag, size = 0x8, scoped, tag = 'scoped memory for tpu_custom_call.1']
    #allocation7 [shape = 'u8[8192]{0}', space=vmem, size = 0x2000, scoped, tag = 'output window, operand 0']
    %11 = vsyncpa [#allocation5], 0
    %12 = vsyncpa [#allocation6], 0
    %s13 = scalar_lea.sflag [#allocation6], 1
    %14 = vsyncpa %s13, 0
    loop: start=0, step=1, limit=4
    $region2: #{tpu_custom_call.1} parent=1 // loop_pre_header
      _
    $region3: #{tpu_custom_call.1} parent=1 // loop_header
      %s16 = sphi 0, %s20
      %p17 = scmp.ge.s32.totalorder %s16, 4
      %s23 = sphi 0, %s35
      %s24 = sphi 0, %s31
      %s25 = sphi 0, %s23
      %s26 = sphi 0, %s24
      %s27 = sphi 0, %s25
      %s28 = sphi 0, %s26
      %s38 = sphi 0, %s40
      %s41 = sphi 0, %s38
      %s42 = sphi 0, %s41
      %s58 = sphi 0, %s42
      %s66 = sphi 0, %s68
      %s69 = sphi 0, %s66
      %s70 = sphi 0, %s69
      %s86 = sphi 0, %s70
    $region4: #{tpu_custom_call.1} parent=1 // loop_header_branch
      %19 = sbr.rel (%p17) target = $region8
    $region5: #{tpu_custom_call.1} parent=1 // loop_body
      %s21 = ssub.s32 %s16, 1
      %s22 = ssub.s32 %s16, 2
      %s29 = sadd.s32 1, %s24
      %p30 = scmp.ge.s32.totalorder %s29, 1
      %s31 = scalar_select %p30, 0, %s29
      %s32 = sadd.s32 1, %s23
      %s33 = scalar_select %p30, %s32, %s23
      %p34 = scmp.ge.s32.totalorder %s33, 2
      %s35 = scalar_select %p34, 0, %s33
      %s36 = ssub.s32 %s24, %s31
      %p37 = scmp.eq.s32.totalorder %s36, 0
      %s39 = sadd.s32 %s38, 1
      %s40 = scalar_select %p37, %s38, %s39
      %p43 = pneg %p37
      %p44 = scmp.eq.s32.totalorder %s16, 1
      %p45 = por %p43, %p44
      %p46 = scmp.ne.s32.totalorder %s38, %s41
      %p47 = scmp.eq.s32.totalorder %s16, 0
      %p48 = por %p46, %p47
      %p49 = scmp.ne.s32.totalorder %s38, %s41
      %p50 = scmp.eq.s32.totalorder %s21, 1
      %p51 = por %p49, %p50
      %p52 = scmp.ne.s32.totalorder %s41, %s42
      %p53 = scmp.eq.s32.totalorder %s21, 0
      %p54 = por %p52, %p53
      %p55 = scmp.ne.s32.totalorder %s41, %s42
      %p56 = scmp.eq.s32.totalorder %s22, 1
      %p57 = por %p55, %p56
      %p59 = scmp.ne.s32.totalorder %s42, %s58
      %p60 = scmp.eq.s32.totalorder %s22, 0
      %p61 = por %p59, %p60
      %s62 = ssub.s32 %s23, %s35
      %s63 = ssub.s32 %s24, %s31
      %s64 = sor.u32 %s62, %s63
      %p65 = scmp.eq.s32.totalorder %s64, 0
      %s67 = sadd.s32 %s66, 1
      %s68 = scalar_select %p65, %s66, %s67
      %p71 = pneg %p65
      %p72 = scmp.eq.s32.totalorder %s16, 1
      %p73 = por %p71, %p72
      %p74 = scmp.ne.s32.totalorder %s66, %s69
      %p75 = scmp.eq.s32.totalorder %s16, 0
      %p76 = por %p74, %p75
      %p77 = scmp.ne.s32.totalorder %s66, %s69
      %p78 = scmp.eq.s32.totalorder %s21, 1
      %p79 = por %p77, %p78
      %p80 = scmp.ne.s32.totalorder %s69, %s70
      %p81 = scmp.eq.s32.totalorder %s21, 0
      %p82 = por %p80, %p81
      %p83 = scmp.ne.s32.totalorder %s69, %s70
      %p84 = scmp.eq.s32.totalorder %s22, 1
      %p85 = por %p83, %p84
      %p87 = scmp.ne.s32.totalorder %s70, %s86
      %p88 = scmp.eq.s32.totalorder %s22, 0
      %p89 = por %p87, %p88
      %p90 = scmp.le.s32.totalorder 1, %s16
      %p91 = scmp.lt.s32.totalorder %s16, 3
      %p92 = pnand %p90, %p91
      %p93 = pneg %p92
      // Predicated region
      $region9: #{tpu_custom_call.1} parent=5 // pred_check
        _
      $region10: #{tpu_custom_call.1} parent=5 // pred_check_branch
        %95 = sbr.rel (%p92) target = $region12
      $region11: #{tpu_custom_call.1} parent=5 // pred_region
        %s96 = ssub.s32 %s16, 1
        // Predicated region
        $region13: #{tpu_custom_call.1} parent=11 // pred_check
          %p97 = pneg %p54
        $region14: #{tpu_custom_call.1} parent=11 // pred_check_branch
          %99 = sbr.rel (%p97) target = $region16
        $region15: #{tpu_custom_call.1} parent=11 // pred_region
          %s101 = ssub.s32 128, 128
          %102 = vsyncadd [#allocation5], %s101
          %s103 = smul.addr %s26, 128
          %s104 = scalar_lea.hbm %s1, %s103
          %s106 = sshll.u32 [#allocation4], 4
          %s107 = int_to_ptr.vmem [resolvable:$true] %s106
          %109 = dma.hbm_to_vmem [thread:$0]  %s104, 128, %s107, [#allocation5]
        $region16: #{tpu_custom_call.1} parent=11 // pred_fallthru
          _
      $region12: #{tpu_custom_call.1} parent=5 // pred_fallthru
        _
      %p110 = scmp.lt.s32.totalorder %s16, 2
      // Predicated region
      $region17: #{tpu_custom_call.1} parent=5 // pred_check
        %p111 = pneg %p110
      $region18: #{tpu_custom_call.1} parent=5 // pred_check_branch
        %113 = sbr.rel (%p111) target = $region20
      $region19: #{tpu_custom_call.1} parent=5 // pred_region
        _
      $region20: #{tpu_custom_call.1} parent=5 // pred_fallthru
        _
      %p114 = scmp.le.s32.totalorder 1, %s16
      %p115 = scmp.lt.s32.totalorder %s16, 3
      %p116 = pnand %p114, %p115
      %p117 = pneg %p116
      // Predicated region
      $region21: #{tpu_custom_call.1} parent=5 // pred_check
        _
      $region22: #{tpu_custom_call.1} parent=5 // pred_check_branch
        %119 = sbr.rel (%p116) target = $region24
      $region23: #{tpu_custom_call.1} parent=5 // pred_region
        %s120 = ssub.s32 %s16, 1
        // Predicated region
        $region25: #{tpu_custom_call.1} parent=23 // pred_check
          %p121 = pneg %p54
        $region26: #{tpu_custom_call.1} parent=23 // pred_check_branch
          %123 = sbr.rel (%p121) target = $region28
        $region27: #{tpu_custom_call.1} parent=23 // pred_region
          %124 = dma.done [#allocation5], 128
        $region28: #{tpu_custom_call.1} parent=23 // pred_fallthru
          _
        %p125 = pneg %p54
        %p126 = pneg %p51
        %p127 = pneg %p82
        %p128 = pneg %p79
        %s129 = sand.u32 %s69, 1
        %s130 = scalar_lea.sflag [#allocation6], %s129
        %s131 = sand.u32 %s69, 1
        %s132 = smul.addr %s131, 8
        %s133 = scalar_lea.vmem [#allocation7], %s132
        %s134 = smul.u32 %s26, 1024
        %v135 = vlaneseq
        %v136 = vshrl.u32 %v135, 7
        %v137 = vlaneseq
        %v138 = vand.u32 %v137, 127
        %v139 = vmul.u32 %v136, 128
        %v140 = vstv %s134
        %v141 = vadd.s32 %v140, %v139
        %v142 = vadd.s32 %v141, %v138
        %s143 = sld [smem:[#allocation3 + %s25]]
        %s144 = smul.u32 %s143, 32
        %v145 = vstv %s144
        %vm146 = vcmp.lt.s32.totalorder %v142, %v145
        %v147 = vld [vmem:[#allocation4] sm:$0xff]
        %v148 = vsel %vm146, %v147, 0.0
        %149 = vst [vmem:[%s133] sm:$0xff] %v148
        %s150 = sand.u32 %s69, 1
        %s151 = scalar_lea.sflag [#allocation6], %s150
        %s152 = sand.u32 %s69, 1
        %s153 = smul.addr %s152, 8
        %s154 = scalar_lea.vmem [#allocation7], %s153
        // Predicated region
        $region29: #{tpu_custom_call.1} parent=23 // pred_check
          %p155 = pneg %p79
        $region30: #{tpu_custom_call.1} parent=23 // pred_check_branch
          %157 = sbr.rel (%p155) target = $region32
        $region31: #{tpu_custom_call.1} parent=23 // pred_region
          %s159 = ssub.s32 128, 128
          %160 = vsyncadd %s151, %s159
          %s161 = sadd.s32 %s26, %s25
          %s162 = smul.addr %s161, 128
          %s163 = scalar_lea.hbm %s2, %s162
          %s165 = sshll.u32 %s154, 4
          %s166 = int_to_ptr.vmem [resolvable:$true] %s165
          %168 = dma.vmem_to_hbm [thread:$0]  %s166, 128, %s163, %s151
        $region32: #{tpu_custom_call.1} parent=23 // pred_fallthru
          _
      $region24: #{tpu_custom_call.1} parent=5 // pred_fallthru
        _
      %p169 = scmp.le.s32.totalorder 2, %s16
      // Predicated region
      $region33: #{tpu_custom_call.1} parent=5 // pred_check
        %p170 = pneg %p169
      $region34: #{tpu_custom_call.1} parent=5 // pred_check_branch
        %172 = sbr.rel (%p170) target = $region36
      $region35: #{tpu_custom_call.1} parent=5 // pred_region
        %s173 = ssub.s32 %s16, 2
        // Predicated region
        $region37: #{tpu_custom_call.1} parent=35 // pred_check
          %p174 = pneg %p85
        $region38: #{tpu_custom_call.1} parent=35 // pred_check_branch
          %176 = sbr.rel (%p174) target = $region40
        $region39: #{tpu_custom_call.1} parent=35 // pred_region
          %s177 = sand.u32 %s70, 1
          %s178 = scalar_lea.sflag [#allocation6], %s177
          %s179 = sand.u32 %s70, 1
          %s180 = smul.addr %s179, 8
          %s181 = scalar_lea.vmem [#allocation7], %s180
          %182 = dma.done %s178, 128
        $region40: #{tpu_custom_call.1} parent=35 // pred_fallthru
          _
      $region36: #{tpu_custom_call.1} parent=5 // pred_fallthru
        _
    $region6: #{tpu_custom_call.1} parent=1 // loop_footer
      %s20 = sadd.s32 1, %s16
    $region7: #{tpu_custom_call.1} parent=1 // loop_footer_branch
      %15 = sbr.rel target = $region3
    $region8: #{tpu_custom_call.1} parent=1 // loop_exit
      _
    %183 = vsyncpa [#allocation5], 1
    %s184 = scalar_lea.sflag [#allocation5], 1
    %185 = vsyncpa %s184, 1
    %186 = vsyncpa [#allocation6], 1
    %s187 = scalar_lea.sflag [#allocation6], 1
    %188 = vsyncpa %s187, 1

</llo_original>
